<compile_context>
chip_gen: v7x
topology: tpu7x:2x2x1
jax: 0.10.0
libtpu: 0.0.40
codegen_flags: <defaults>
</compile_context>

<pallas_src>
import functools

import jax
import jax.numpy as jnp
import numpy as np
from jax.experimental import pallas as pl
from jax.experimental.pallas import tpu as pltpu


def _round_up(a, b):
    return (a + b - 1) // b * b


def _conv_stats_kernel(w_ref, p_ref, conv_ref, sum_ref, sq_ref):
    """Per M-tile: conv tile = Wmat @ patchesT (bf16 MXU, f32 accumulate), plus
    per-tile per-channel sum / sum-of-squares written to tile-indexed outputs
    (no cross-iteration carry -> grid axis can be 'parallel')."""
    y = jnp.dot(w_ref[...], p_ref[...], preferred_element_type=jnp.float32)
    conv_ref[...] = y
    c = y.shape[0]
    s = jnp.sum(y, axis=1, keepdims=True)        # (C_out_pad, 1) partial sum (XLU)
    q = jnp.sum(y * y, axis=1, keepdims=True)    # (C_out_pad, 1) partial sum of squares
    sum_ref[0] = jnp.broadcast_to(s, (c, 128))
    sq_ref[0] = jnp.broadcast_to(q, (c, 128))


def _bn_relu_kernel(conv_ref, scale_ref, shift_ref, out_ref):
    """Per M-tile: out = max(scale * conv + shift, 0). scale/shift are precomputed
    per-channel BN coefficients (hoisted out of the per-tile path)."""
    out_ref[...] = jnp.maximum(conv_ref[...] * scale_ref[...] + shift_ref[...], 0.0)


@functools.partial(jax.jit, static_argnames=("eps", "tm"))
def conv3d_bn_relu(x, weight, bias, gamma, beta, *, eps=1e-5, tm=512):
    """x: (N, C_in, D, H, W) f32; weight: (C_out, C_in, 3, 3, 3); bias/gamma/beta: (C_out,)."""
    del bias  # cancels exactly under training-mode BatchNorm (mean subtraction)

    N, C_in, D, H, W = x.shape
    C_out, _, kD, kH, kW = weight.shape
    pd, ph, pw = kD // 2, kH // 2, kW // 2           # 'same' padding, stride 1

    M = N * D * H * W
    K = C_in * kD * kH * kW
    K_pad = _round_up(K, 128)                        # lane/MXU-aligned contraction
    C_out_pad = _round_up(C_out, 8)                  # sublane-aligned output rows
    tm = min(tm, _round_up(M, 128))
    M_pad = _round_up(M, tm)
    num_tiles = M_pad // tm

    # ---- glue (XLA): pad + im2col in transposed (K, M) layout, bf16 ----
    xp = jnp.pad(x, ((0, 0), (0, 0), (pd, pd), (ph, ph), (pw, pw)))
    slabs = [xp[:, :, kd:kd + D, kh:kh + H, kw:kw + W]
             for kd in range(kD) for kh in range(kH) for kw in range(kW)]
    pat = jnp.stack(slabs, axis=2)                   # (N, C_in, taps, D, H, W)
    pat = pat.transpose(1, 2, 0, 3, 4, 5)            # (C_in, taps, N, D, H, W)
    patches = pat.reshape(K, M)
    patches = jnp.pad(patches, ((0, K_pad - K), (0, M_pad - M)))
    patches = patches.astype(jnp.bfloat16)

    wmat = weight.reshape(C_out, K).astype(jnp.float32)
    wmat = jnp.pad(wmat, ((0, C_out_pad - C_out), (0, K_pad - K))).astype(jnp.bfloat16)

    # ---- pass 1: conv matmul + per-tile channel sum / sum-of-squares ----
    conv_out, psum, psq = pl.pallas_call(
        _conv_stats_kernel,
        out_shape=(
            jax.ShapeDtypeStruct((C_out_pad, M_pad), jnp.float32),
            jax.ShapeDtypeStruct((num_tiles, C_out_pad, 128), jnp.float32),
            jax.ShapeDtypeStruct((num_tiles, C_out_pad, 128), jnp.float32),
        ),
        grid_spec=pltpu.PrefetchScalarGridSpec(
            num_scalar_prefetch=0,
            grid=(num_tiles,),
            in_specs=[
                pl.BlockSpec((C_out_pad, K_pad), lambda i: (0, 0)),   # resident weights
                pl.BlockSpec((K_pad, tm), lambda i: (0, i)),          # streamed patches
            ],
            out_specs=(
                pl.BlockSpec((C_out_pad, tm), lambda i: (0, i)),      # lane-dense output
                pl.BlockSpec((1, C_out_pad, 128), lambda i: (i, 0, 0)),
                pl.BlockSpec((1, C_out_pad, 128), lambda i: (i, 0, 0)),
            ),
        ),
        compiler_params=pltpu.CompilerParams(
            dimension_semantics=("parallel",)),
    )(wmat, patches)

    # ---- tiny cross-tile reduction + BN scale/shift (hoisted out of pass 2) ----
    csum = jnp.sum(psum[:, :, 0], axis=0)            # (C_out_pad,)
    csq = jnp.sum(psq[:, :, 0], axis=0)
    mean = csum / float(M)                           # padded M columns contribute 0
    var = jnp.maximum(csq / float(M) - mean * mean, 0.0)   # biased (training) variance
    # TODO(synk): for very large M / large per-channel means use a shifted/Welford
    #   accumulation to avoid cancellation in E[y^2] - E[y]^2.
    gamma_p = jnp.pad(gamma.astype(jnp.float32), (0, C_out_pad - C_out),
                      constant_values=1.0)
    beta_p = jnp.pad(beta.astype(jnp.float32), (0, C_out_pad - C_out))
    inv = jax.lax.rsqrt(var + eps)
    scale = (gamma_p * inv).reshape(C_out_pad, 1)
    shift = (beta_p - mean * gamma_p * inv).reshape(C_out_pad, 1)

    # ---- pass 2: out = max(scale*conv + shift, 0), written in place over conv_out ----
    out_flat = pl.pallas_call(
        _bn_relu_kernel,
        out_shape=jax.ShapeDtypeStruct((C_out_pad, M_pad), jnp.float32),
        grid_spec=pltpu.PrefetchScalarGridSpec(
            num_scalar_prefetch=0,
            grid=(num_tiles,),
            in_specs=[
                pl.BlockSpec((C_out_pad, tm), lambda i: (0, i)),
                pl.BlockSpec((C_out_pad, 1), lambda i: (0, 0)),
                pl.BlockSpec((C_out_pad, 1), lambda i: (0, 0)),
            ],
            out_specs=pl.BlockSpec((C_out_pad, tm), lambda i: (0, i)),
        ),
        input_output_aliases={0: 0},                 # reuse the conv buffer
        compiler_params=pltpu.CompilerParams(
            dimension_semantics=("parallel",)),
    )(conv_out, scale, shift)

    # ---- glue: back to NCDHW ----
    out = out_flat[:C_out, :M].reshape(C_out, N, D, H, W).transpose(1, 0, 2, 3, 4)
    return out


def _reference(x, weight, bias, gamma, beta, eps=1e-5):
    conv = jax.lax.conv_general_dilated(
        x, weight, window_strides=(1, 1, 1),
        padding=((1, 1), (1, 1), (1, 1)),
        dimension_numbers=("NCDHW", "OIDHW", "NCDHW"),
        precision=jax.lax.Precision.HIGHEST)
    conv = conv + bias.reshape(1, -1, 1, 1, 1)
    mean = conv.mean(axis=(0, 2, 3, 4), keepdims=True)
    var = ((conv - mean) ** 2).mean(axis=(0, 2, 3, 4), keepdims=True)
    y = (conv - mean) * jax.lax.rsqrt(var + eps)
    y = y * gamma.reshape(1, -1, 1, 1, 1) + beta.reshape(1, -1, 1, 1, 1)
    return jnp.maximum(y, 0.0)


if __name__ == "__main__":
    key = jax.random.PRNGKey(0)
    k1, k2, k3 = jax.random.split(key, 3)

    # Small shapes consistent with Conv3d/BatchNorm3d: NCDHW input.
    N, C_in, C_out, D, H, W = 2, 4, 8, 8, 8, 8
    x = jax.random.normal(k1, (N, C_in, D, H, W), jnp.float32)
    weight = jax.random.normal(k2, (C_out, C_in, 3, 3, 3), jnp.float32) * 0.1
    bias = jax.random.normal(k3, (C_out,), jnp.float32) * 0.1
    gamma = jnp.ones((C_out,), jnp.float32)    # BatchNorm3d default weight
    beta = jnp.zeros((C_out,), jnp.float32)    # BatchNorm3d default bias
    # TODO(synk): running_mean/running_var updates of BatchNorm3d are stateful and
    # don't affect the returned activations; they are not modeled here.

    out = conv3d_bn_relu(x, weight, bias, gamma, beta)
    out = jax.block_until_ready(out)

    ref = _reference(x, weight, bias, gamma, beta)
    # Tolerance accounts for bf16 matmul operands (f32 accumulation) vs. f32 reference.
    np.testing.assert_allclose(np.asarray(out), np.asarray(ref), rtol=3e-2, atol=3e-2)
    print("KERNEL_OK")
</pallas_src>

<mosaic_0001>
module attributes {stable_mosaic.version = 11 : i64} {
  func.func @_conv_stats_kernel(%arg0: i32, %arg1: memref<8x128xbf16, #tpu.memory_space<vmem>>, %arg2: memref<128x512xbf16, #tpu.memory_space<vmem>>, %arg3: memref<8x512xf32, #tpu.memory_space<vmem>>, %arg4: memref<1x8x128xf32, #tpu.memory_space<vmem>>, %arg5: memref<1x8x128xf32, #tpu.memory_space<vmem>>) attributes {dimension_semantics = [#tpu.dimension_semantics<parallel>], iteration_bounds = array<i64: 2>, scalar_prefetch = 0 : i64, scratch_operands = 0 : i64, tpu.core_type = #tpu.core_type<tc>, window_params = [{pipeline_mode = #tpu.pipeline_mode<synchronous>, transform_indices = @transform_0, window_bounds = array<i64: 8, 128>}, {transform_indices = @transform_1, window_bounds = array<i64: 128, 512>}, {transform_indices = @transform_2, window_bounds = array<i64: 8, 512>}, {transform_indices = @transform_3, window_bounds = array<i64: 1, 8, 128>}, {transform_indices = @transform_4, window_bounds = array<i64: 1, 8, 128>}]} {
    %c0 = arith.constant 0 : index
    %c0_0 = arith.constant 0 : index
    %0 = vector.load %arg1[%c0, %c0_0] : memref<8x128xbf16, #tpu.memory_space<vmem>>, vector<8x128xbf16>
    %c0_1 = arith.constant 0 : index
    %c0_2 = arith.constant 0 : index
    %1 = vector.load %arg2[%c0_1, %c0_2] : memref<128x512xbf16, #tpu.memory_space<vmem>>, vector<128x512xbf16>
    %cst = arith.constant dense<0.000000e+00> : vector<8x512xf32>
    %2 = tpu.matmul %0, %1, %cst {dimension_numbers = #tpu.dot_dimension_numbers<[1], [0], [0], [1], [0, 0, 1, 1], [], []>} : vector<8x128xbf16>, vector<128x512xbf16>, vector<8x512xf32> -> vector<8x512xf32>
    %c0_3 = arith.constant 0 : index
    %c0_4 = arith.constant 0 : index
    %3 = vector.load %arg3[%c0_3, %c0_4] : memref<8x512xf32, #tpu.memory_space<vmem>>, vector<8x512xf32>
    tpu.vector_store %arg3[%c0_3, %c0_4], %2 {strides = array<i32>} : memref<8x512xf32, #tpu.memory_space<vmem>>, vector<8x512xf32>,
    %cst_5 = arith.constant dense<0.000000e+00> : vector<8xf32>
    %4 = vector.multi_reduction <add>, %2, %cst_5 [1] : vector<8x512xf32> to vector<8xf32>
    %5 = vector.shape_cast %4 : vector<8xf32> to vector<8x1xf32>
    %6 = arith.mulf %2, %2 : vector<8x512xf32>
    %cst_6 = arith.constant dense<0.000000e+00> : vector<8xf32>
    %7 = vector.multi_reduction <add>, %6, %cst_6 [1] : vector<8x512xf32> to vector<8xf32>
    %8 = vector.shape_cast %7 : vector<8xf32> to vector<8x1xf32>
    %9 = vector.shape_cast %5 : vector<8x1xf32> to vector<8x1xf32>
    %10 = vector.broadcast %9 : vector<8x1xf32> to vector<8x128xf32>
    %c0_7 = arith.constant 0 : index
    %c0_8 = arith.constant 0 : index
    %c0_9 = arith.constant 0 : index
    %11 = vector.load %arg4[%c0_7, %c0_8, %c0_9] : memref<1x8x128xf32, #tpu.memory_space<vmem>>, vector<1x8x128xf32>
    %12 = vector.shape_cast %11 : vector<1x8x128xf32> to vector<8x128xf32>
    %13 = vector.shape_cast %10 : vector<8x128xf32> to vector<1x8x128xf32>
    tpu.vector_store %arg4[%c0_7, %c0_8, %c0_9], %13 {strides = array<i32>} : memref<1x8x128xf32, #tpu.memory_space<vmem>>, vector<1x8x128xf32>,
    %14 = vector.shape_cast %8 : vector<8x1xf32> to vector<8x1xf32>
    %15 = vector.broadcast %14 : vector<8x1xf32> to vector<8x128xf32>
    %c0_10 = arith.constant 0 : index
    %c0_11 = arith.constant 0 : index
    %c0_12 = arith.constant 0 : index
    %16 = vector.load %arg5[%c0_10, %c0_11, %c0_12] : memref<1x8x128xf32, #tpu.memory_space<vmem>>, vector<1x8x128xf32>
    %17 = vector.shape_cast %16 : vector<1x8x128xf32> to vector<8x128xf32>
    %18 = vector.shape_cast %15 : vector<8x128xf32> to vector<1x8x128xf32>
    tpu.vector_store %arg5[%c0_10, %c0_11, %c0_12], %18 {strides = array<i32>} : memref<1x8x128xf32, #tpu.memory_space<vmem>>, vector<1x8x128xf32>,
    return
  }
  func.func @transform_0(%arg0: i32) -> (i32, i32) {
    %c0_i32 = arith.constant 0 : i32
    %c0_i32_0 = arith.constant 0 : i32
    %c0_i32_1 = arith.constant 0 : i32
    return %c0_i32, %c0_i32_0 : i32, i32
  }
  func.func @transform_1(%arg0: i32) -> (i32, i32) {
    %c0_i32 = arith.constant 0 : i32
    %c0_i32_0 = arith.constant 0 : i32
    return %c0_i32, %arg0 : i32, i32
  }
  func.func @transform_2(%arg0: i32) -> (i32, i32) {
    %c0_i32 = arith.constant 0 : i32
    %c0_i32_0 = arith.constant 0 : i32
    return %c0_i32, %arg0 : i32, i32
  }
  func.func @transform_3(%arg0: i32) -> (i32, i32, i32) {
    %c0_i32 = arith.constant 0 : i32
    %c0_i32_0 = arith.constant 0 : i32
    %c0_i32_1 = arith.constant 0 : i32
    return %arg0, %c0_i32, %c0_i32_0 : i32, i32, i32
  }
  func.func @transform_4(%arg0: i32) -> (i32, i32, i32) {
    %c0_i32 = arith.constant 0 : i32
    %c0_i32_0 = arith.constant 0 : i32
    %c0_i32_1 = arith.constant 0 : i32
    return %arg0, %c0_i32, %c0_i32_0 : i32, i32, i32
  }
}

module attributes {stable_mosaic.version = 11 : i64} {
  func.func @_bn_relu_kernel(%arg0: i32, %arg1: memref<8x512xf32, #tpu.memory_space<vmem>>, %arg2: memref<8x1xf32, #tpu.memory_space<vmem>>, %arg3: memref<8x1xf32, #tpu.memory_space<vmem>>, %arg4: memref<8x512xf32, #tpu.memory_space<vmem>>) attributes {dimension_semantics = [#tpu.dimension_semantics<parallel>], iteration_bounds = array<i64: 2>, scalar_prefetch = 0 : i64, scratch_operands = 0 : i64, tpu.core_type = #tpu.core_type<tc>, window_params = [{transform_indices = @transform_0, window_bounds = array<i64: 8, 512>}, {pipeline_mode = #tpu.pipeline_mode<synchronous>, transform_indices = @transform_1, window_bounds = array<i64: 8, 1>}, {pipeline_mode = #tpu.pipeline_mode<synchronous>, transform_indices = @transform_2, window_bounds = array<i64: 8, 1>}, {transform_indices = @transform_3, window_bounds = array<i64: 8, 512>}]} {
    %c0 = arith.constant 0 : index
    %c0_0 = arith.constant 0 : index
    %0 = vector.load %arg1[%c0, %c0_0] : memref<8x512xf32, #tpu.memory_space<vmem>>, vector<8x512xf32>
    %c0_1 = arith.constant 0 : index
    %c0_2 = arith.constant 0 : index
    %1 = vector.load %arg2[%c0_1, %c0_2] : memref<8x1xf32, #tpu.memory_space<vmem>>, vector<8x1xf32>
    %2 = vector.broadcast %1 : vector<8x1xf32> to vector<8x512xf32>
    %3 = arith.mulf %0, %2 : vector<8x512xf32>
    %c0_3 = arith.constant 0 : index
    %c0_4 = arith.constant 0 : index
    %4 = vector.load %arg3[%c0_3, %c0_4] : memref<8x1xf32, #tpu.memory_space<vmem>>, vector<8x1xf32>
    %5 = vector.broadcast %4 : vector<8x1xf32> to vector<8x512xf32>
    %6 = arith.addf %3, %5 : vector<8x512xf32>
    %cst = arith.constant 0.000000e+00 : f32
    %7 = vector.broadcast %cst : f32 to vector<8x512xf32>
    %8 = arith.maximumf %6, %7 : vector<8x512xf32>
    %c0_5 = arith.constant 0 : index
    %c0_6 = arith.constant 0 : index
    %9 = vector.load %arg4[%c0_5, %c0_6] : memref<8x512xf32, #tpu.memory_space<vmem>>, vector<8x512xf32>
    tpu.vector_store %arg4[%c0_5, %c0_6], %8 {strides = array<i32>} : memref<8x512xf32, #tpu.memory_space<vmem>>, vector<8x512xf32>,
    return
  }
  func.func @transform_0(%arg0: i32) -> (i32, i32) {
    %c0_i32 = arith.constant 0 : i32
    %c0_i32_0 = arith.constant 0 : i32
    return %c0_i32, %arg0 : i32, i32
  }
  func.func @transform_1(%arg0: i32) -> (i32, i32) {
    %c0_i32 = arith.constant 0 : i32
    %c0_i32_0 = arith.constant 0 : i32
    %c0_i32_1 = arith.constant 0 : i32
    return %c0_i32, %c0_i32_0 : i32, i32
  }
  func.func @transform_2(%arg0: i32) -> (i32, i32) {
    %c0_i32 = arith.constant 0 : i32
    %c0_i32_0 = arith.constant 0 : i32
    %c0_i32_1 = arith.constant 0 : i32
    return %c0_i32, %c0_i32_0 : i32, i32
  }
  func.func @transform_3(%arg0: i32) -> (i32, i32) {
    %c0_i32 = arith.constant 0 : i32
    %c0_i32_0 = arith.constant 0 : i32
    return %c0_i32, %arg0 : i32, i32
  }
}

</mosaic_0001>

<llo_original>
// kernel: conv3d_bn_relu.2
$region0: #{conv3d_bn_relu.2}
  #allocation0 [shape = 'u32[]', space=smem, size = 0x4, offset = 0x4, fixed_abs, tag = 'smem constant byte address 0x4 - core index']
  #allocation1 [shape = 'u32[144,128]{1,0:T(1,128)}', space=vmem, size = 0x12000, scoped, tag = 'internal scratch']
  %s0 = inlined_call_operand.vmem [shape: bf16[8,128], index: 0, kind: input, shape index: {}]
  %s1 = inlined_call_operand.vmem [shape: bf16[128,1024], index: 1, kind: input, shape index: {}]
  %s2 = inlined_call_operand.vmem [shape: f32[8,1024], index: 2, kind: output, shape index: {0}]
  %s3 = inlined_call_operand.vmem [shape: f32[2,8,128], index: 3, kind: output, shape index: {1}]
  %s4 = inlined_call_operand.vmem [shape: f32[2,8,128], index: 4, kind: output, shape index: {2}]
  %5 = xla_tuple %s2, %s3, %s4
  %s6 = sld [smem:[#allocation0]]
  $region80: #{conv3d_bn_relu.2} parent=0
    _
  %s8 = ssub.s32 1, %s6
  %s9 = scalar_select 0, %s8, %s6
  $region1: #{conv3d_bn_relu.2} parent=0
    #allocation2 [shape = 'u8[262144]{0}', space=vmem, size = 0x40000, scoped, tag = 'input window, operand 1']
    loop: start=0, step=1, limit=4
    $region2: #{conv3d_bn_relu.2} parent=1 // loop_pre_header
      _
    $region3: #{conv3d_bn_relu.2} parent=1 // loop_header
      %s11 = sphi 0, %s15
      %p12 = scmp.ge.s32.totalorder %s11, 4
      %s19 = sphi 0, %s19
      %s21 = sphi 0, %s19
      %s22 = sphi 0, %s21
      %s36 = sphi 0, %s22
      %s42 = sphi 0, %s44
      %s45 = sphi 0, %s42
      %s46 = sphi 0, %s45
      %s62 = sphi 0, %s46
      %s68 = sphi 0, %s70
      %s71 = sphi 0, %s68
      %s72 = sphi 0, %s71
      %s88 = sphi 0, %s72
      %s94 = sphi 0, %s96
      %s97 = sphi 0, %s94
      %s98 = sphi 0, %s97
      %s114 = sphi 0, %s98
      %s120 = sphi 0, %s122
      %s123 = sphi 0, %s120
      %s124 = sphi 0, %s123
      %s140 = sphi 0, %s124
    $region4: #{conv3d_bn_relu.2} parent=1 // loop_header_branch
      %14 = sbr.rel (%p12) target = $region8
    $region5: #{conv3d_bn_relu.2} parent=1 // loop_body
      %s16 = ssub.s32 %s11, 1
      %s17 = ssub.s32 %s11, 2
      %s18 = sadd.s32 %s11, 1
      %s20 = sadd.s32 %s19, 1
      %p23 = scmp.eq.s32.totalorder %s11, 1
      %p24 = scmp.ne.s32.totalorder %s19, %s21
      %p25 = scmp.eq.s32.totalorder %s11, 0
      %p26 = por %p24, %p25
      %p27 = scmp.ne.s32.totalorder %s19, %s21
      %p28 = scmp.eq.s32.totalorder %s16, 1
      %p29 = por %p27, %p28
      %p30 = scmp.ne.s32.totalorder %s21, %s22
      %p31 = scmp.eq.s32.totalorder %s16, 0
      %p32 = por %p30, %p31
      %p33 = scmp.ne.s32.totalorder %s21, %s22
      %p34 = scmp.eq.s32.totalorder %s17, 1
      %p35 = por %p33, %p34
      %p37 = scmp.ne.s32.totalorder %s22, %s36
      %p38 = scmp.eq.s32.totalorder %s17, 0
      %p39 = por %p37, %p38
      %s40 = ssub.s32 %s11, %s18
      %p41 = scmp.eq.s32.totalorder %s40, 0
      %s43 = sadd.s32 %s42, 1
      %s44 = scalar_select %p41, %s42, %s43
      %p47 = pneg %p41
      %p48 = scmp.eq.s32.totalorder %s11, 1
      %p49 = por %p47, %p48
      %p50 = scmp.ne.s32.totalorder %s42, %s45
      %p51 = scmp.eq.s32.totalorder %s11, 0
      %p52 = por %p50, %p51
      %p53 = scmp.ne.s32.totalorder %s42, %s45
      %p54 = scmp.eq.s32.totalorder %s16, 1
      %p55 = por %p53, %p54
      %p56 = scmp.ne.s32.totalorder %s45, %s46
      %p57 = scmp.eq.s32.totalorder %s16, 0
      %p58 = por %p56, %p57
      %p59 = scmp.ne.s32.totalorder %s45, %s46
      %p60 = scmp.eq.s32.totalorder %s17, 1
      %p61 = por %p59, %p60
      %p63 = scmp.ne.s32.totalorder %s46, %s62
      %p64 = scmp.eq.s32.totalorder %s17, 0
      %p65 = por %p63, %p64
      %s66 = ssub.s32 %s11, %s18
      %p67 = scmp.eq.s32.totalorder %s66, 0
      %s69 = sadd.s32 %s68, 1
      %s70 = scalar_select %p67, %s68, %s69
      %p73 = pneg %p67
      %p74 = scmp.eq.s32.totalorder %s11, 1
      %p75 = por %p73, %p74
      %p76 = scmp.ne.s32.totalorder %s68, %s71
      %p77 = scmp.eq.s32.totalorder %s11, 0
      %p78 = por %p76, %p77
      %p79 = scmp.ne.s32.totalorder %s68, %s71
      %p80 = scmp.eq.s32.totalorder %s16, 1
      %p81 = por %p79, %p80
      %p82 = scmp.ne.s32.totalorder %s71, %s72
      %p83 = scmp.eq.s32.totalorder %s16, 0
      %p84 = por %p82, %p83
      %p85 = scmp.ne.s32.totalorder %s71, %s72
      %p86 = scmp.eq.s32.totalorder %s17, 1
      %p87 = por %p85, %p86
      %p89 = scmp.ne.s32.totalorder %s72, %s88
      %p90 = scmp.eq.s32.totalorder %s17, 0
      %p91 = por %p89, %p90
      %s92 = ssub.s32 %s11, %s18
      %p93 = scmp.eq.s32.totalorder %s92, 0
      %s95 = sadd.s32 %s94, 1
      %s96 = scalar_select %p93, %s94, %s95
      %p99 = pneg %p93
      %p100 = scmp.eq.s32.totalorder %s11, 1
      %p101 = por %p99, %p100
      %p102 = scmp.ne.s32.totalorder %s94, %s97
      %p103 = scmp.eq.s32.totalorder %s11, 0
      %p104 = por %p102, %p103
      %p105 = scmp.ne.s32.totalorder %s94, %s97
      %p106 = scmp.eq.s32.totalorder %s16, 1
      %p107 = por %p105, %p106
      %p108 = scmp.ne.s32.totalorder %s97, %s98
      %p109 = scmp.eq.s32.totalorder %s16, 0
      %p110 = por %p108, %p109
      %p111 = scmp.ne.s32.totalorder %s97, %s98
      %p112 = scmp.eq.s32.totalorder %s17, 1
      %p113 = por %p111, %p112
      %p115 = scmp.ne.s32.totalorder %s98, %s114
      %p116 = scmp.eq.s32.totalorder %s17, 0
      %p117 = por %p115, %p116
      %s118 = ssub.s32 %s11, %s18
      %p119 = scmp.eq.s32.totalorder %s118, 0
      %s121 = sadd.s32 %s120, 1
      %s122 = scalar_select %p119, %s120, %s121
      %p125 = pneg %p119
      %p126 = scmp.eq.s32.totalorder %s11, 1
      %p127 = por %p125, %p126
      %p128 = scmp.ne.s32.totalorder %s120, %s123
      %p129 = scmp.eq.s32.totalorder %s11, 0
      %p130 = por %p128, %p129
      %p131 = scmp.ne.s32.totalorder %s120, %s123
      %p132 = scmp.eq.s32.totalorder %s16, 1
      %p133 = por %p131, %p132
      %p134 = scmp.ne.s32.totalorder %s123, %s124
      %p135 = scmp.eq.s32.totalorder %s16, 0
      %p136 = por %p134, %p135
      %p137 = scmp.ne.s32.totalorder %s123, %s124
      %p138 = scmp.eq.s32.totalorder %s17, 1
      %p139 = por %p137, %p138
      %p141 = scmp.ne.s32.totalorder %s124, %s140
      %p142 = scmp.eq.s32.totalorder %s17, 0
      %p143 = por %p141, %p142
      %p144 = scmp.le.s32.totalorder 1, %s11
      %p145 = scmp.lt.s32.totalorder %s11, 3
      %p146 = pnand %p144, %p145
      %p147 = pneg %p146
      // Predicated region
      $region9: #{conv3d_bn_relu.2} parent=5 // pred_check
        _
      $region10: #{conv3d_bn_relu.2} parent=5 // pred_check_branch
        %149 = sbr.rel (%p146) target = $region12
      $region11: #{conv3d_bn_relu.2} parent=5 // pred_region
        %s150 = ssub.s32 %s11, 1
        // Predicated region
        $region13: #{conv3d_bn_relu.2} parent=11 // pred_check
          %p151 = pneg %p32
        $region14: #{conv3d_bn_relu.2} parent=11 // pred_check_branch
          %153 = sbr.rel (%p151) target = $region16
        $region15: #{conv3d_bn_relu.2} parent=11 // pred_region
          _
        $region16: #{conv3d_bn_relu.2} parent=11 // pred_fallthru
          _
      $region12: #{conv3d_bn_relu.2} parent=5 // pred_fallthru
        _
      %p154 = scmp.lt.s32.totalorder %s11, 2
      // Predicated region
      $region17: #{conv3d_bn_relu.2} parent=5 // pred_check
        %p155 = pneg %p154
      $region18: #{conv3d_bn_relu.2} parent=5 // pred_check_branch
        %157 = sbr.rel (%p155) target = $region20
      $region19: #{conv3d_bn_relu.2} parent=5 // pred_region
        // Predicated region
        $region21: #{conv3d_bn_relu.2} parent=19 // pred_check
          %p158 = pneg %p52
        $region22: #{conv3d_bn_relu.2} parent=19 // pred_check_branch
          %160 = sbr.rel (%p158) target = $region24
        $region23: #{conv3d_bn_relu.2} parent=19 // pred_region
          %s161 = sand.u32 %s42, 1
          %s162 = sand.u32 %s42, 1
          %s163 = smul.addr %s162, 256
          %s164 = scalar_lea.vmem [#allocation2], %s163
          %s165 = smul.u32 4, %s11
          %s166 = smul.addr %s165, 4
          %s167 = scalar_lea.vmem %s1, %s166
          // Predicated region
          $region25: #{conv3d_bn_relu.2} parent=23 // pred_check
            _
          $region26: #{conv3d_bn_relu.2} parent=23 // pred_check_branch
            %169 = sbr.rel (0) target = $region28
          $region27: #{conv3d_bn_relu.2} parent=23 // pred_region
            // Predicated region
            $region29: #{conv3d_bn_relu.2} parent=27 // pred_check
              _
            $region30: #{conv3d_bn_relu.2} parent=27 // pred_check_branch
              %171 = sbr.rel (0) target = $region32
            $region31: #{conv3d_bn_relu.2} parent=27 // pred_region
              loop: start=0, step=1, limit=1
              $region33: #{conv3d_bn_relu.2} parent=31 // loop_pre_header
                _
              $region34: #{conv3d_bn_relu.2} parent=31 // loop_header
                %s173 = sphi 0, %s177
                %p174 = scmp.ge.s32.totalorder %s173, 1
                %s178 = sphi %s167, %s167
                %s179 = sphi %s164, %s164
              $region35: #{conv3d_bn_relu.2} parent=31 // loop_header_branch
                %176 = sbr.rel (%p174) target = $region39
              $region36: #{conv3d_bn_relu.2} parent=31 // loop_body
                %v180 = vld [vmem:[%s178] sm:$0xff]
                %181 = vst [vmem:[%s179] sm:$0xff] %v180
                %v182 = vld [vmem:[%s178 + $0x8] sm:$0xff]
                %183 = vst [vmem:[%s179 + $0x8] sm:$0xff] %v182
                %v184 = vld [vmem:[%s178 + $0x20] sm:$0xff]
                %185 = vst [vmem:[%s179 + $0x10] sm:$0xff] %v184
                %v186 = vld [vmem:[%s178 + $0x28] sm:$0xff]
                %187 = vst [vmem:[%s179 + $0x18] sm:$0xff] %v186
                %v188 = vld [vmem:[%s178 + $0x40] sm:$0xff]
                %189 = vst [vmem:[%s179 + $0x20] sm:$0xff] %v188
                %v190 = vld [vmem:[%s178 + $0x48] sm:$0xff]
                %191 = vst [vmem:[%s179 + $0x28] sm:$0xff] %v190
                %v192 = vld [vmem:[%s178 + $0x60] sm:$0xff]
                %193 = vst [vmem:[%s179 + $0x30] sm:$0xff] %v192
                %v194 = vld [vmem:[%s178 + $0x68] sm:$0xff]
                %195 = vst [vmem:[%s179 + $0x38] sm:$0xff] %v194
                %v196 = vld [vmem:[%s178 + $0x80] sm:$0xff]
                %197 = vst [vmem:[%s179 + $0x40] sm:$0xff] %v196
                %v198 = vld [vmem:[%s178 + $0x88] sm:$0xff]
                %199 = vst [vmem:[%s179 + $0x48] sm:$0xff] %v198
                %v200 = vld [vmem:[%s178 + $0xa0] sm:$0xff]
                %201 = vst [vmem:[%s179 + $0x50] sm:$0xff] %v200
                %v202 = vld [vmem:[%s178 + $0xa8] sm:$0xff]
                %203 = vst [vmem:[%s179 + $0x58] sm:$0xff] %v202
                %v204 = vld [vmem:[%s178 + $0xc0] sm:$0xff]
                %205 = vst [vmem:[%s179 + $0x60] sm:$0xff] %v204
                %v206 = vld [vmem:[%s178 + $0xc8] sm:$0xff]
                %207 = vst [vmem:[%s179 + $0x68] sm:$0xff] %v206
                %v208 = vld [vmem:[%s178 + $0xe0] sm:$0xff]
                %209 = vst [vmem:[%s179 + $0x70] sm:$0xff] %v208
                %v210 = vld [vmem:[%s178 + $0xe8] sm:$0xff]
                %211 = vst [vmem:[%s179 + $0x78] sm:$0xff] %v210
                %v212 = vld [vmem:[%s178 + $0x100] sm:$0xff]
                %213 = vst [vmem:[%s179 + $0x80] sm:$0xff] %v212
                %v214 = vld [vmem:[%s178 + $0x108] sm:$0xff]
                %215 = vst [vmem:[%s179 + $0x88] sm:$0xff] %v214
                %v216 = vld [vmem:[%s178 + $0x120] sm:$0xff]
                %217 = vst [vmem:[%s179 + $0x90] sm:$0xff] %v216
                %v218 = vld [vmem:[%s178 + $0x128] sm:$0xff]
                %219 = vst [vmem:[%s179 + $0x98] sm:$0xff] %v218
                %v220 = vld [vmem:[%s178 + $0x140] sm:$0xff]
                %221 = vst [vmem:[%s179 + $0xa0] sm:$0xff] %v220
                %v222 = vld [vmem:[%s178 + $0x148] sm:$0xff]
                %223 = vst [vmem:[%s179 + $0xa8] sm:$0xff] %v222
                %v224 = vld [vmem:[%s178 + $0x160] sm:$0xff]
                %225 = vst [vmem:[%s179 + $0xb0] sm:$0xff] %v224
                %v226 = vld [vmem:[%s178 + $0x168] sm:$0xff]
                %227 = vst [vmem:[%s179 + $0xb8] sm:$0xff] %v226
                %v228 = vld [vmem:[%s178 + $0x180] sm:$0xff]
                %229 = vst [vmem:[%s179 + $0xc0] sm:$0xff] %v228
                %v230 = vld [vmem:[%s178 + $0x188] sm:$0xff]
                %231 = vst [vmem:[%s179 + $0xc8] sm:$0xff] %v230
                %v232 = vld [vmem:[%s178 + $0x1a0] sm:$0xff]
                %233 = vst [vmem:[%s179 + $0xd0] sm:$0xff] %v232
                %v234 = vld [vmem:[%s178 + $0x1a8] sm:$0xff]
                %235 = vst [vmem:[%s179 + $0xd8] sm:$0xff] %v234
                %v236 = vld [vmem:[%s178 + $0x1c0] sm:$0xff]
                %237 = vst [vmem:[%s179 + $0xe0] sm:$0xff] %v236
                %v238 = vld [vmem:[%s178 + $0x1c8] sm:$0xff]
                %239 = vst [vmem:[%s179 + $0xe8] sm:$0xff] %v238
                %v240 = vld [vmem:[%s178 + $0x1e0] sm:$0xff]
                %241 = vst [vmem:[%s179 + $0xf0] sm:$0xff] %v240
                %v242 = vld [vmem:[%s178 + $0x1e8] sm:$0xff]
                %243 = vst [vmem:[%s179 + $0xf8] sm:$0xff] %v242
              $region37: #{conv3d_bn_relu.2} parent=31 // loop_footer
                %s177 = sadd.s32 1, %s173
              $region38: #{conv3d_bn_relu.2} parent=31 // loop_footer_branch
                %172 = sbr.rel target = $region34
              $region39: #{conv3d_bn_relu.2} parent=31 // loop_exit
                _
            $region32: #{conv3d_bn_relu.2} parent=27 // pred_fallthru
              _
            // Predicated region
            $region40: #{conv3d_bn_relu.2} parent=27 // pred_check
              _
            $region41: #{conv3d_bn_relu.2} parent=27 // pred_check_branch
              %245 = sbr.rel target = $region43
            $region42: #{conv3d_bn_relu.2} parent=27 // pred_region
              _
            $region43: #{conv3d_bn_relu.2} parent=27 // pred_fallthru
              _
          $region28: #{conv3d_bn_relu.2} parent=23 // pred_fallthru
            _
          %246 = vnop
        $region24: #{conv3d_bn_relu.2} parent=19 // pred_fallthru
          _
      $region20: #{conv3d_bn_relu.2} parent=5 // pred_fallthru
        _
      %p247 = scmp.le.s32.totalorder 1, %s11
      %p248 = scmp.lt.s32.totalorder %s11, 3
      %p249 = pnand %p247, %p248
      %p250 = pneg %p249
      // Predicated region
      $region44: #{conv3d_bn_relu.2} parent=5 // pred_check
        _
      $region45: #{conv3d_bn_relu.2} parent=5 // pred_check_branch
        %252 = sbr.rel (%p249) target = $region47
      $region46: #{conv3d_bn_relu.2} parent=5 // pred_region
        %s253 = ssub.s32 %s11, 1
        %s254 = sand.u32 %s45, 1
        %s255 = sand.u32 %s45, 1
        %s256 = smul.addr %s255, 256
        %s257 = scalar_lea.vmem [#allocation2], %s256
        // Predicated region
        $region48: #{conv3d_bn_relu.2} parent=46 // pred_check
          %p258 = pneg %p58
        $region49: #{conv3d_bn_relu.2} parent=46 // pred_check_branch
          %260 = sbr.rel (%p258) target = $region51
        $region50: #{conv3d_bn_relu.2} parent=46 // pred_region
          _
        $region51: #{conv3d_bn_relu.2} parent=46 // pred_fallthru
          _
        %p261 = pneg %p32
        %p262 = pneg %p29
        %s263 = sand.u32 %s45, 1
        %s264 = sand.u32 %s45, 1
        %s265 = smul.addr %s264, 256
        %s266 = scalar_lea.vmem [#allocation2], %s265
        %p267 = pneg %p58
        %p268 = pneg %p55
        %p269 = pneg %p84
        %p270 = pneg %p81
        %s271 = smul.u32 4, %s16
        %p272 = scmp.lt.s32.totalorder %s271, 7
        %s273 = scalar_select %p272, %s271, 7
        %s274 = smul.addr %s273, 8
        %s275 = scalar_lea.vmem %s2, %s274
        %p276 = pneg %p110
        %p277 = pneg %p107
        %p278 = scmp.lt.s32.totalorder %s16, 1
        %s279 = scalar_select %p278, %s16, 1
        %s280 = smul.addr %s279, 8
        %s281 = scalar_lea.vmem %s3, %s280
        %p282 = pneg %p136
        %p283 = pneg %p133
        %p284 = scmp.lt.s32.totalorder %s16, 1
        %s285 = scalar_select %p284, %s16, 1
        %s286 = smul.addr %s285, 8
        %s287 = scalar_lea.vmem %s4, %s286
        %s288 = smul.u32 4, %s16
        %s289 = smul.u32 4, %s16
        %p290 = scmp.lt.s32.totalorder %s289, 7
        %s291 = scalar_select %p290, %s289, 7
        %s292 = smul.addr %s291, 8
        %s293 = scalar_lea.vmem %s2, %s292
        %s294 = smul.u32 4, %s16
        %p295 = scmp.lt.s32.totalorder %s16, 1
        %s296 = scalar_select %p295, %s16, 1
        %s297 = smul.addr %s296, 8
        %s298 = scalar_lea.vmem %s3, %s297
        %p299 = scmp.lt.s32.totalorder %s16, 1
        %s300 = scalar_select %p299, %s16, 1
        %s301 = smul.addr %s300, 8
        %s302 = scalar_lea.vmem %s4, %s301
        %v304 = vld [vmem:[%s0] sm:$0xf]
        %v305 = vld [vmem:[%s257] sm:$0xff]
        %v306 = vld [vmem:[%s257 + $0x8] sm:$0xff]
        %v307 = vld [vmem:[%s257 + $0x10] sm:$0xff]
        %v308 = vld [vmem:[%s257 + $0x18] sm:$0xff]
        %v309 = vld [vmem:[%s257 + $0x20] sm:$0xff]
        %v310 = vld [vmem:[%s257 + $0x28] sm:$0xff]
        %v311 = vld [vmem:[%s257 + $0x30] sm:$0xff]
        %v312 = vld [vmem:[%s257 + $0x38] sm:$0xff]
        %v313 = vld [vmem:[%s257 + $0x40] sm:$0xff]
        %v314 = vld [vmem:[%s257 + $0x48] sm:$0xff]
        %v315 = vld [vmem:[%s257 + $0x50] sm:$0xff]
        %v316 = vld [vmem:[%s257 + $0x58] sm:$0xff]
        %v317 = vld [vmem:[%s257 + $0x60] sm:$0xff]
        %v318 = vld [vmem:[%s257 + $0x68] sm:$0xff]
        %v319 = vld [vmem:[%s257 + $0x70] sm:$0xff]
        %v320 = vld [vmem:[%s257 + $0x78] sm:$0xff]
        %v321 = vld [vmem:[%s257 + $0x80] sm:$0xff]
        %v322 = vld [vmem:[%s257 + $0x88] sm:$0xff]
        %v323 = vld [vmem:[%s257 + $0x90] sm:$0xff]
        %v324 = vld [vmem:[%s257 + $0x98] sm:$0xff]
        %v325 = vld [vmem:[%s257 + $0xa0] sm:$0xff]
        %v326 = vld [vmem:[%s257 + $0xa8] sm:$0xff]
        %v327 = vld [vmem:[%s257 + $0xb0] sm:$0xff]
        %v328 = vld [vmem:[%s257 + $0xb8] sm:$0xff]
        %v329 = vld [vmem:[%s257 + $0xc0] sm:$0xff]
        %v330 = vld [vmem:[%s257 + $0xc8] sm:$0xff]
        %v331 = vld [vmem:[%s257 + $0xd0] sm:$0xff]
        %v332 = vld [vmem:[%s257 + $0xd8] sm:$0xff]
        %v333 = vld [vmem:[%s257 + $0xe0] sm:$0xff]
        %v334 = vld [vmem:[%s257 + $0xe8] sm:$0xff]
        %v335 = vld [vmem:[%s257 + $0xf0] sm:$0xff]
        %v336 = vld [vmem:[%s257 + $0xf8] sm:$0xff]
        %v369 = vunpack.c.l.b16 %v305
        %v370 = vunpack.c.h.b16 %v305
        %v371 = vunpack.c.l.b16 %v306
        %v372 = vunpack.c.h.b16 %v306
        %v373 = vunpack.c.l.b16 %v307
        %v374 = vunpack.c.h.b16 %v307
        %v375 = vunpack.c.l.b16 %v308
        %v376 = vunpack.c.h.b16 %v308
        %v377 = vunpack.c.l.b16 %v309
        %v378 = vunpack.c.h.b16 %v309
        %v379 = vunpack.c.l.b16 %v310
        %v380 = vunpack.c.h.b16 %v310
        %v381 = vunpack.c.l.b16 %v311
        %v382 = vunpack.c.h.b16 %v311
        %v383 = vunpack.c.l.b16 %v312
        %v384 = vunpack.c.h.b16 %v312
        %v385 = vunpack.c.l.b16 %v313
        %v386 = vunpack.c.h.b16 %v313
        %v387 = vunpack.c.l.b16 %v314
        %v388 = vunpack.c.h.b16 %v314
        %v389 = vunpack.c.l.b16 %v315
        %v390 = vunpack.c.h.b16 %v315
        %v391 = vunpack.c.l.b16 %v316
        %v392 = vunpack.c.h.b16 %v316
        %v393 = vunpack.c.l.b16 %v317
        %v394 = vunpack.c.h.b16 %v317
        %v395 = vunpack.c.l.b16 %v318
        %v396 = vunpack.c.h.b16 %v318
        %v397 = vunpack.c.l.b16 %v319
        %v398 = vunpack.c.h.b16 %v319
        %v399 = vunpack.c.l.b16 %v320
        %v400 = vunpack.c.h.b16 %v320
        %v401 = vunpack.c.l.b16 %v321
        %v402 = vunpack.c.h.b16 %v321
        %v403 = vunpack.c.l.b16 %v322
        %v404 = vunpack.c.h.b16 %v322
        %v405 = vunpack.c.l.b16 %v323
        %v406 = vunpack.c.h.b16 %v323
        %v407 = vunpack.c.l.b16 %v324
        %v408 = vunpack.c.h.b16 %v324
        %v409 = vunpack.c.l.b16 %v325
        %v410 = vunpack.c.h.b16 %v325
        %v411 = vunpack.c.l.b16 %v326
        %v412 = vunpack.c.h.b16 %v326
        %v413 = vunpack.c.l.b16 %v327
        %v414 = vunpack.c.h.b16 %v327
        %v415 = vunpack.c.l.b16 %v328
        %v416 = vunpack.c.h.b16 %v328
        %v417 = vunpack.c.l.b16 %v329
        %v418 = vunpack.c.h.b16 %v329
        %v419 = vunpack.c.l.b16 %v330
        %v420 = vunpack.c.h.b16 %v330
        %v421 = vunpack.c.l.b16 %v331
        %v422 = vunpack.c.h.b16 %v331
        %v423 = vunpack.c.l.b16 %v332
        %v424 = vunpack.c.h.b16 %v332
        %v425 = vunpack.c.l.b16 %v333
        %v426 = vunpack.c.h.b16 %v333
        %v427 = vunpack.c.l.b16 %v334
        %v428 = vunpack.c.h.b16 %v334
        %v429 = vunpack.c.l.b16 %v335
        %v430 = vunpack.c.h.b16 %v335
        %v431 = vunpack.c.l.b16 %v336
        %v432 = vunpack.c.h.b16 %v336
        %v433 = vpack.c.b16 %v373, %v369
        %v434 = vpack.c.b16 %v374, %v370
        %v435 = vpack.c.b16 %v375, %v371
        %v436 = vpack.c.b16 %v376, %v372
        %v437 = vpack.c.b16 %v381, %v377
        %v438 = vpack.c.b16 %v382, %v378
        %v439 = vpack.c.b16 %v383, %v379
        %v440 = vpack.c.b16 %v384, %v380
        %v441 = vpack.c.b16 %v389, %v385
        %v442 = vpack.c.b16 %v390, %v386
        %v443 = vpack.c.b16 %v391, %v387
        %v444 = vpack.c.b16 %v392, %v388
        %v445 = vpack.c.b16 %v397, %v393
        %v446 = vpack.c.b16 %v398, %v394
        %v447 = vpack.c.b16 %v399, %v395
        %v448 = vpack.c.b16 %v400, %v396
        %v449 = vpack.c.b16 %v405, %v401
        %v450 = vpack.c.b16 %v406, %v402
        %v451 = vpack.c.b16 %v407, %v403
        %v452 = vpack.c.b16 %v408, %v404
        %v453 = vpack.c.b16 %v413, %v409
        %v454 = vpack.c.b16 %v414, %v410
        %v455 = vpack.c.b16 %v415, %v411
        %v456 = vpack.c.b16 %v416, %v412
        %v457 = vpack.c.b16 %v421, %v417
        %v458 = vpack.c.b16 %v422, %v418
        %v459 = vpack.c.b16 %v423, %v419
        %v460 = vpack.c.b16 %v424, %v420
        %v461 = vpack.c.b16 %v429, %v425
        %v462 = vpack.c.b16 %v430, %v426
        %v463 = vpack.c.b16 %v431, %v427
        %v464 = vpack.c.b16 %v432, %v428
        %497 = vmatprep.subr.bf16.mxu0 %v434
        %498 = vmatpush1.bf16.msra.mxu0 %v433
        %499 = vmatprep.subr.bf16.mxu0 %v438
        %500 = vmatpush1.bf16.msra.mxu0 %v437
        %501 = vmatprep.subr.bf16.mxu0 %v442
        %502 = vmatpush1.bf16.msra.mxu0 %v441
        %503 = vmatprep.subr.bf16.mxu0 %v446
        %504 = vmatpush1.bf16.msra.mxu0 %v445
        %505 = vmatprep.subr.bf16.mxu0 %v450
        %506 = vmatpush1.bf16.msra.mxu0 %v449
        %507 = vmatprep.subr.bf16.mxu0 %v454
        %508 = vmatpush1.bf16.msra.mxu0 %v453
        %509 = vmatprep.subr.bf16.mxu0 %v458
        %510 = vmatpush1.bf16.msra.mxu0 %v457
        %511 = vmatprep.subr.bf16.mxu0 %v462
        %512 = vmatpush1.bf16.msra.mxu0 %v461
        %513 = vmatprep.subr.bf16.mxu0 0
        %514 = vmatpush1.bf16.msra.mxu0 0
        %515 = vmatprep.subr.bf16.mxu0 0
        %516 = vmatpush1.bf16.msra.mxu0 0
        %517 = vmatprep.subr.bf16.mxu0 0
        %518 = vmatpush1.bf16.msra.mxu0 0
        %519 = vmatprep.subr.bf16.mxu0 0
        %520 = vmatpush1.bf16.msra.mxu0 0
        %521 = vmatprep.subr.bf16.mxu0 0
        %522 = vmatpush1.bf16.msra.mxu0 0
        %523 = vmatprep.subr.bf16.mxu0 0
        %524 = vmatpush1.bf16.msra.mxu0 0
        %525 = vmatprep.subr.bf16.mxu0 0
        %526 = vmatpush1.bf16.msra.mxu0 0
        %527 = vmatprep.subr.bf16.mxu0 0
        %528 = vmatpush1.bf16.msra.mxu0 0
        %529 = vmatprep.mubr.bf16.mxu0 0
        %530 = vmatmul.mubr.bf16.gmra.mrb[0].mxu0 %v304
        %v531 = vpop.f32.mrb[0].mxu0
        %v532 = vadd.f32 0.0, %v531
        %v533 = vpop.f32.mrb[0].mxu0
        %v534 = vadd.f32 0.0, %v533
        %v535 = vpop.f32.mrb[0].mxu0
        %v536 = vpop.f32.mrb[0].mxu0
        %537 = vdwg.mxu0
        %538 = vmatprep.subr.bf16.mxu0 %v436
        %539 = vmatpush1.bf16.msra.mxu0 %v435
        %540 = vmatprep.subr.bf16.mxu0 %v440
        %541 = vmatpush1.bf16.msra.mxu0 %v439
        %542 = vmatprep.subr.bf16.mxu0 %v444
        %543 = vmatpush1.bf16.msra.mxu0 %v443
        %544 = vmatprep.subr.bf16.mxu0 %v448
        %545 = vmatpush1.bf16.msra.mxu0 %v447
        %546 = vmatprep.subr.bf16.mxu0 %v452
        %547 = vmatpush1.bf16.msra.mxu0 %v451
        %548 = vmatprep.subr.bf16.mxu0 %v456
        %549 = vmatpush1.bf16.msra.mxu0 %v455
        %550 = vmatprep.subr.bf16.mxu0 %v460
        %551 = vmatpush1.bf16.msra.mxu0 %v459
        %552 = vmatprep.subr.bf16.mxu0 %v464
        %553 = vmatpush1.bf16.msra.mxu0 %v463
        %554 = vmatprep.subr.bf16.mxu0 0
        %555 = vmatpush1.bf16.msra.mxu0 0
        %556 = vmatprep.subr.bf16.mxu0 0
        %557 = vmatpush1.bf16.msra.mxu0 0
        %558 = vmatprep.subr.bf16.mxu0 0
        %559 = vmatpush1.bf16.msra.mxu0 0
        %560 = vmatprep.subr.bf16.mxu0 0
        %561 = vmatpush1.bf16.msra.mxu0 0
        %562 = vmatprep.subr.bf16.mxu0 0
        %563 = vmatpush1.bf16.msra.mxu0 0
        %564 = vmatprep.subr.bf16.mxu0 0
        %565 = vmatpush1.bf16.msra.mxu0 0
        %566 = vmatprep.subr.bf16.mxu0 0
        %567 = vmatpush1.bf16.msra.mxu0 0
        %568 = vmatprep.subr.bf16.mxu0 0
        %569 = vmatpush1.bf16.msra.mxu0 0
        %570 = vmatprep.mubr.bf16.mxu0 0
        %571 = vmatmul.mubr.bf16.gmra.mrb[0].mxu0 %v304
        %v572 = vpop.f32.mrb[0].mxu0
        %v573 = vadd.f32 0.0, %v572
        %v574 = vpop.f32.mrb[0].mxu0
        %v575 = vadd.f32 0.0, %v574
        %v576 = vpop.f32.mrb[0].mxu0
        %v577 = vpop.f32.mrb[0].mxu0
        %578 = vdwg.mxu0
        %579 = vst [vmem:[%s293] sm:$0xff] %v532
        %580 = vst [vmem:[%s293 + $0x8] sm:$0xff] %v534
        %581 = vst [vmem:[%s293 + $0x10] sm:$0xff] %v573
        %582 = vst [vmem:[%s293 + $0x18] sm:$0xff] %v575
        %v583 = vadd.f32 %v532, %v534
        %v584 = vadd.f32 %v583, %v573
        %v585 = vadd.f32 %v584, %v575
        %586 = vadd.xlane.f32.xlu0 %v585
        %v587 = vpop.xlane.xlu0 %586
        %v588 = vmul.f32 %v532, %v532
        %v589 = vmul.f32 %v534, %v534
        %v590 = vmul.f32 %v573, %v573
        %v591 = vmul.f32 %v575, %v575
        %v592 = vadd.f32 %v588, %v589
        %v593 = vadd.f32 %v592, %v590
        %v594 = vadd.f32 %v593, %v591
        %595 = vadd.xlane.f32.xlu0 %v594
        %v596 = vpop.xlane.xlu0 %595
        %597 = vst [vmem:[%s298] sm:$0xff] %v587
        %598 = vst [vmem:[%s302] sm:$0xff] %v596
        %s599 = smul.u32 4, %s16
        %p600 = scmp.lt.s32.totalorder %s599, 7
        %s601 = scalar_select %p600, %s599, 7
        %s602 = smul.addr %s601, 8
        %s603 = scalar_lea.vmem %s2, %s602
        %p604 = scmp.lt.s32.totalorder %s16, 1
        %s605 = scalar_select %p604, %s16, 1
        %s606 = smul.addr %s605, 8
        %s607 = scalar_lea.vmem %s3, %s606
        %p608 = scmp.lt.s32.totalorder %s16, 1
        %s609 = scalar_select %p608, %s16, 1
        %s610 = smul.addr %s609, 8
        %s611 = scalar_lea.vmem %s4, %s610
        // Predicated region
        $region52: #{conv3d_bn_relu.2} parent=46 // pred_check
          %p612 = pneg %p81
        $region53: #{conv3d_bn_relu.2} parent=46 // pred_check_branch
          %614 = sbr.rel (%p612) target = $region55
        $region54: #{conv3d_bn_relu.2} parent=46 // pred_region
          %s615 = smul.u32 4, %s16
        $region55: #{conv3d_bn_relu.2} parent=46 // pred_fallthru
          _
        // Predicated region
        $region56: #{conv3d_bn_relu.2} parent=46 // pred_check
          %p616 = pneg %p107
        $region57: #{conv3d_bn_relu.2} parent=46 // pred_check_branch
          %618 = sbr.rel (%p616) target = $region59
        $region58: #{conv3d_bn_relu.2} parent=46 // pred_region
          _
        $region59: #{conv3d_bn_relu.2} parent=46 // pred_fallthru
          _
        // Predicated region
        $region60: #{conv3d_bn_relu.2} parent=46 // pred_check
          %p619 = pneg %p133
        $region61: #{conv3d_bn_relu.2} parent=46 // pred_check_branch
          %621 = sbr.rel (%p619) target = $region63
        $region62: #{conv3d_bn_relu.2} parent=46 // pred_region
          _
        $region63: #{conv3d_bn_relu.2} parent=46 // pred_fallthru
          _
      $region47: #{conv3d_bn_relu.2} parent=5 // pred_fallthru
        _
      %p622 = scmp.le.s32.totalorder 2, %s11
      // Predicated region
      $region64: #{conv3d_bn_relu.2} parent=5 // pred_check
        %p623 = pneg %p622
      $region65: #{conv3d_bn_relu.2} parent=5 // pred_check_branch
        %625 = sbr.rel (%p623) target = $region67
      $region66: #{conv3d_bn_relu.2} parent=5 // pred_region
        %s626 = ssub.s32 %s11, 2
        // Predicated region
        $region68: #{conv3d_bn_relu.2} parent=66 // pred_check
          %p627 = pneg %p87
        $region69: #{conv3d_bn_relu.2} parent=66 // pred_check_branch
          %629 = sbr.rel (%p627) target = $region71
        $region70: #{conv3d_bn_relu.2} parent=66 // pred_region
          %s630 = smul.u32 4, %s17
          %p631 = scmp.lt.s32.totalorder %s630, 7
          %s632 = scalar_select %p631, %s630, 7
          %s633 = smul.addr %s632, 8
          %s634 = scalar_lea.vmem %s2, %s633
        $region71: #{conv3d_bn_relu.2} parent=66 // pred_fallthru
          _
        // Predicated region
        $region72: #{conv3d_bn_relu.2} parent=66 // pred_check
          %p635 = pneg %p113
        $region73: #{conv3d_bn_relu.2} parent=66 // pred_check_branch
          %637 = sbr.rel (%p635) target = $region75
        $region74: #{conv3d_bn_relu.2} parent=66 // pred_region
          %p638 = scmp.lt.s32.totalorder %s17, 1
          %s639 = scalar_select %p638, %s17, 1
          %s640 = smul.addr %s639, 8
          %s641 = scalar_lea.vmem %s3, %s640
        $region75: #{conv3d_bn_relu.2} parent=66 // pred_fallthru
          _
        // Predicated region
        $region76: #{conv3d_bn_relu.2} parent=66 // pred_check
          %p642 = pneg %p139
        $region77: #{conv3d_bn_relu.2} parent=66 // pred_check_branch
          %644 = sbr.rel (%p642) target = $region79
        $region78: #{conv3d_bn_relu.2} parent=66 // pred_region
          %p645 = scmp.lt.s32.totalorder %s17, 1
          %s646 = scalar_select %p645, %s17, 1
          %s647 = smul.addr %s646, 8
          %s648 = scalar_lea.vmem %s4, %s647
        $region79: #{conv3d_bn_relu.2} parent=66 // pred_fallthru
          _
      $region67: #{conv3d_bn_relu.2} parent=5 // pred_fallthru
        _
    $region6: #{conv3d_bn_relu.2} parent=1 // loop_footer
      %s15 = sadd.s32 1, %s11
    $region7: #{conv3d_bn_relu.2} parent=1 // loop_footer_branch
      %10 = sbr.rel target = $region3
    $region8: #{conv3d_bn_relu.2} parent=1 // loop_exit
      _

// kernel: conv3d_bn_relu.3
$region0: #{conv3d_bn_relu.3}
  #allocation0 [shape = 'u32[]', space=smem, size = 0x4, offset = 0x4, fixed_abs, tag = 'smem constant byte address 0x4 - core index']
  #allocation1 [shape = 'u32[144,128]{1,0:T(1,128)}', space=vmem, size = 0x12000, scoped, tag = 'internal scratch']
  %s0 = inlined_call_operand.vmem [shape: f32[8,1024], index: 0, kind: input, shape index: {}, may-alias: {0,3}]
  %s1 = inlined_call_operand.vmem [shape: f32[8,1], index: 1, kind: input, shape index: {}]
  %s2 = inlined_call_operand.vmem [shape: f32[8,1], index: 2, kind: input, shape index: {}]
  %s3 = inlined_call_operand.vmem [shape: f32[8,1024], index: 3, kind: output, shape index: {}, may-alias: {0,3}]
  %s4 = sld [smem:[#allocation0]]
  $region45: #{conv3d_bn_relu.3} parent=0
    _
  %s6 = ssub.s32 1, %s4
  %s7 = scalar_select 0, %s6, %s4
  loop: start=0, step=1, limit=4
  $region2: #{conv3d_bn_relu.3} parent=0 // loop_pre_header
    _
  $region3: #{conv3d_bn_relu.3} parent=0 // loop_header
    %s9 = sphi 0, %s13
    %p10 = scmp.ge.s32.totalorder %s9, 4
    %s19 = sphi 0, %s21
    %s22 = sphi 0, %s19
    %s23 = sphi 0, %s22
    %s39 = sphi 0, %s23
    %s43 = sphi 0, %s43
    %s45 = sphi 0, %s43
    %s46 = sphi 0, %s45
    %s60 = sphi 0, %s46
    %s64 = sphi 0, %s64
    %s66 = sphi 0, %s64
    %s67 = sphi 0, %s66
    %s81 = sphi 0, %s67
    %s87 = sphi 0, %s89
    %s90 = sphi 0, %s87
    %s91 = sphi 0, %s90
    %s107 = sphi 0, %s91
  $region4: #{conv3d_bn_relu.3} parent=0 // loop_header_branch
    %12 = sbr.rel (%p10) target = $region8
  $region5: #{conv3d_bn_relu.3} parent=0 // loop_body
    %s14 = ssub.s32 %s9, 1
    %s15 = ssub.s32 %s9, 2
    %s16 = sadd.s32 %s9, 1
    %s17 = ssub.s32 %s9, %s16
    %p18 = scmp.eq.s32.totalorder %s17, 0
    %s20 = sadd.s32 %s19, 1
    %s21 = scalar_select %p18, %s19, %s20
    %p24 = pneg %p18
    %p25 = scmp.eq.s32.totalorder %s9, 1
    %p26 = por %p24, %p25
    %p27 = scmp.ne.s32.totalorder %s19, %s22
    %p28 = scmp.eq.s32.totalorder %s9, 0
    %p29 = por %p27, %p28
    %p30 = scmp.ne.s32.totalorder %s19, %s22
    %p31 = scmp.eq.s32.totalorder %s14, 1
    %p32 = por %p30, %p31
    %p33 = scmp.ne.s32.totalorder %s22, %s23
    %p34 = scmp.eq.s32.totalorder %s14, 0
    %p35 = por %p33, %p34
    %p36 = scmp.ne.s32.totalorder %s22, %s23
    %p37 = scmp.eq.s32.totalorder %s15, 1
    %p38 = por %p36, %p37
    %p40 = scmp.ne.s32.totalorder %s23, %s39
    %p41 = scmp.eq.s32.totalorder %s15, 0
    %p42 = por %p40, %p41
    %s44 = sadd.s32 %s43, 1
    %p47 = scmp.eq.s32.totalorder %s9, 1
    %p48 = scmp.ne.s32.totalorder %s43, %s45
    %p49 = scmp.eq.s32.totalorder %s9, 0
    %p50 = por %p48, %p49
    %p51 = scmp.ne.s32.totalorder %s43, %s45
    %p52 = scmp.eq.s32.totalorder %s14, 1
    %p53 = por %p51, %p52
    %p54 = scmp.ne.s32.totalorder %s45, %s46
    %p55 = scmp.eq.s32.totalorder %s14, 0
    %p56 = por %p54, %p55
    %p57 = scmp.ne.s32.totalorder %s45, %s46
    %p58 = scmp.eq.s32.totalorder %s15, 1
    %p59 = por %p57, %p58
    %p61 = scmp.ne.s32.totalorder %s46, %s60
    %p62 = scmp.eq.s32.totalorder %s15, 0
    %p63 = por %p61, %p62
    %s65 = sadd.s32 %s64, 1
    %p68 = scmp.eq.s32.totalorder %s9, 1
    %p69 = scmp.ne.s32.totalorder %s64, %s66
    %p70 = scmp.eq.s32.totalorder %s9, 0
    %p71 = por %p69, %p70
    %p72 = scmp.ne.s32.totalorder %s64, %s66
    %p73 = scmp.eq.s32.totalorder %s14, 1
    %p74 = por %p72, %p73
    %p75 = scmp.ne.s32.totalorder %s66, %s67
    %p76 = scmp.eq.s32.totalorder %s14, 0
    %p77 = por %p75, %p76
    %p78 = scmp.ne.s32.totalorder %s66, %s67
    %p79 = scmp.eq.s32.totalorder %s15, 1
    %p80 = por %p78, %p79
    %p82 = scmp.ne.s32.totalorder %s67, %s81
    %p83 = scmp.eq.s32.totalorder %s15, 0
    %p84 = por %p82, %p83
    %s85 = ssub.s32 %s9, %s16
    %p86 = scmp.eq.s32.totalorder %s85, 0
    %s88 = sadd.s32 %s87, 1
    %s89 = scalar_select %p86, %s87, %s88
    %p92 = pneg %p86
    %p93 = scmp.eq.s32.totalorder %s9, 1
    %p94 = por %p92, %p93
    %p95 = scmp.ne.s32.totalorder %s87, %s90
    %p96 = scmp.eq.s32.totalorder %s9, 0
    %p97 = por %p95, %p96
    %p98 = scmp.ne.s32.totalorder %s87, %s90
    %p99 = scmp.eq.s32.totalorder %s14, 1
    %p100 = por %p98, %p99
    %p101 = scmp.ne.s32.totalorder %s90, %s91
    %p102 = scmp.eq.s32.totalorder %s14, 0
    %p103 = por %p101, %p102
    %p104 = scmp.ne.s32.totalorder %s90, %s91
    %p105 = scmp.eq.s32.totalorder %s15, 1
    %p106 = por %p104, %p105
    %p108 = scmp.ne.s32.totalorder %s91, %s107
    %p109 = scmp.eq.s32.totalorder %s15, 0
    %p110 = por %p108, %p109
    %p111 = scmp.le.s32.totalorder 1, %s9
    %p112 = scmp.lt.s32.totalorder %s9, 3
    %p113 = pnand %p111, %p112
    %p114 = pneg %p113
    // Predicated region
    $region9: #{conv3d_bn_relu.3} parent=5 // pred_check
      _
    $region10: #{conv3d_bn_relu.3} parent=5 // pred_check_branch
      %116 = sbr.rel (%p113) target = $region12
    $region11: #{conv3d_bn_relu.3} parent=5 // pred_region
      %s117 = ssub.s32 %s9, 1
      // Predicated region
      $region13: #{conv3d_bn_relu.3} parent=11 // pred_check
        %p118 = pneg %p56
      $region14: #{conv3d_bn_relu.3} parent=11 // pred_check_branch
        %120 = sbr.rel (%p118) target = $region16
      $region15: #{conv3d_bn_relu.3} parent=11 // pred_region
        _
      $region16: #{conv3d_bn_relu.3} parent=11 // pred_fallthru
        _
      // Predicated region
      $region17: #{conv3d_bn_relu.3} parent=11 // pred_check
        %p121 = pneg %p77
      $region18: #{conv3d_bn_relu.3} parent=11 // pred_check_branch
        %123 = sbr.rel (%p121) target = $region20
      $region19: #{conv3d_bn_relu.3} parent=11 // pred_region
        _
      $region20: #{conv3d_bn_relu.3} parent=11 // pred_fallthru
        _
    $region12: #{conv3d_bn_relu.3} parent=5 // pred_fallthru
      _
    %p124 = scmp.lt.s32.totalorder %s9, 2
    // Predicated region
    $region21: #{conv3d_bn_relu.3} parent=5 // pred_check
      %p125 = pneg %p124
    $region22: #{conv3d_bn_relu.3} parent=5 // pred_check_branch
      %127 = sbr.rel (%p125) target = $region24
    $region23: #{conv3d_bn_relu.3} parent=5 // pred_region
      // Predicated region
      $region25: #{conv3d_bn_relu.3} parent=23 // pred_check
        %p128 = pneg %p29
      $region26: #{conv3d_bn_relu.3} parent=23 // pred_check_branch
        %130 = sbr.rel (%p128) target = $region28
      $region27: #{conv3d_bn_relu.3} parent=23 // pred_region
        %s131 = smul.u32 4, %s9
        %p132 = scmp.lt.s32.totalorder %s131, 7
        %s133 = scalar_select %p132, %s131, 7
        %s134 = smul.addr %s133, 8
        %s135 = scalar_lea.vmem %s0, %s134
        %s136 = smul.u32 4, %s9
      $region28: #{conv3d_bn_relu.3} parent=23 // pred_fallthru
        _
    $region24: #{conv3d_bn_relu.3} parent=5 // pred_fallthru
      _
    %p137 = scmp.le.s32.totalorder 1, %s9
    %p138 = scmp.lt.s32.totalorder %s9, 3
    %p139 = pnand %p137, %p138
    %p140 = pneg %p139
    // Predicated region
    $region29: #{conv3d_bn_relu.3} parent=5 // pred_check
      _
    $region30: #{conv3d_bn_relu.3} parent=5 // pred_check_branch
      %142 = sbr.rel (%p139) target = $region32
    $region31: #{conv3d_bn_relu.3} parent=5 // pred_region
      %s143 = ssub.s32 %s9, 1
      %s144 = smul.u32 4, %s14
      %p145 = scmp.lt.s32.totalorder %s144, 7
      %s146 = scalar_select %p145, %s144, 7
      %s147 = smul.addr %s146, 8
      %s148 = scalar_lea.vmem %s0, %s147
      %p149 = pneg %p35
      %p150 = pneg %p32
      %p151 = pneg %p56
      %p152 = pneg %p53
      %p153 = pneg %p77
      %p154 = pneg %p74
      %p155 = pneg %p103
      %p156 = pneg %p100
      %s157 = smul.u32 4, %s14
      %p158 = scmp.lt.s32.totalorder %s157, 7
      %s159 = scalar_select %p158, %s157, 7
      %s160 = smul.addr %s159, 8
      %s161 = scalar_lea.vmem %s3, %s160
      %s162 = smul.u32 4, %s14
      %p163 = scmp.lt.s32.totalorder %s162, 7
      %s164 = scalar_select %p163, %s162, 7
      %s165 = smul.addr %s164, 8
      %s166 = scalar_lea.vmem %s0, %s165
      %s167 = smul.u32 4, %s14
      %s168 = smul.u32 4, %s14
      %p169 = scmp.lt.s32.totalorder %s168, 7
      %s170 = scalar_select %p169, %s168, 7
      %s171 = smul.addr %s170, 8
      %s172 = scalar_lea.vmem %s3, %s171
      %s173 = smul.u32 4, %s14
      %v174 = vld [vmem:[%s166] sm:$0xff]
      %v175 = vld [vmem:[%s166 + $0x8] sm:$0xff]
      %v176 = vld [vmem:[%s166 + $0x10] sm:$0xff]
      %v177 = vld [vmem:[%s166 + $0x18] sm:$0xff]
      %v178 = vld [vmem:[%s1] sm:$0xff]
      %180 = vset.pattern.permute.xlu0 0
      %181 = vperm.xlu0 %180, %v178
      %v182 = vpop.permute.xlu0 %181
      %v184 = vmul.f32 %v174, %v182
      %v185 = vmul.f32 %v175, %v182
      %v186 = vmul.f32 %v176, %v182
      %v187 = vmul.f32 %v177, %v182
      %v188 = vld [vmem:[%s2] sm:$0xff]
      %190 = vset.pattern.permute.xlu0 0
      %191 = vperm.xlu0 %190, %v188
      %v192 = vpop.permute.xlu0 %191
      %v194 = vadd.f32 %v184, %v192
      %v195 = vadd.f32 %v185, %v192
      %v196 = vadd.f32 %v186, %v192
      %v197 = vadd.f32 %v187, %v192
      %v198 = vmax.f32 %v194, 0.0
      %v199 = vmax.f32 %v195, 0.0
      %v200 = vmax.f32 %v196, 0.0
      %v201 = vmax.f32 %v197, 0.0
      %202 = vst [vmem:[%s172] sm:$0xff] %v198
      %203 = vst [vmem:[%s172 + $0x8] sm:$0xff] %v199
      %204 = vst [vmem:[%s172 + $0x10] sm:$0xff] %v200
      %205 = vst [vmem:[%s172 + $0x18] sm:$0xff] %v201
      %s206 = smul.u32 4, %s14
      %p207 = scmp.lt.s32.totalorder %s206, 7
      %s208 = scalar_select %p207, %s206, 7
      %s209 = smul.addr %s208, 8
      %s210 = scalar_lea.vmem %s3, %s209
      // Predicated region
      $region33: #{conv3d_bn_relu.3} parent=31 // pred_check
        %p211 = pneg %p100
      $region34: #{conv3d_bn_relu.3} parent=31 // pred_check_branch
        %213 = sbr.rel (%p211) target = $region36
      $region35: #{conv3d_bn_relu.3} parent=31 // pred_region
        %s214 = smul.u32 4, %s14
      $region36: #{conv3d_bn_relu.3} parent=31 // pred_fallthru
        _
    $region32: #{conv3d_bn_relu.3} parent=5 // pred_fallthru
      _
    %p215 = scmp.le.s32.totalorder 2, %s9
    // Predicated region
    $region37: #{conv3d_bn_relu.3} parent=5 // pred_check
      %p216 = pneg %p215
    $region38: #{conv3d_bn_relu.3} parent=5 // pred_check_branch
      %218 = sbr.rel (%p216) target = $region40
    $region39: #{conv3d_bn_relu.3} parent=5 // pred_region
      %s219 = ssub.s32 %s9, 2
      // Predicated region
      $region41: #{conv3d_bn_relu.3} parent=39 // pred_check
        %p220 = pneg %p106
      $region42: #{conv3d_bn_relu.3} parent=39 // pred_check_branch
        %222 = sbr.rel (%p220) target = $region44
      $region43: #{conv3d_bn_relu.3} parent=39 // pred_region
        %s223 = smul.u32 4, %s15
        %p224 = scmp.lt.s32.totalorder %s223, 7
        %s225 = scalar_select %p224, %s223, 7
        %s226 = smul.addr %s225, 8
        %s227 = scalar_lea.vmem %s3, %s226
      $region44: #{conv3d_bn_relu.3} parent=39 // pred_fallthru
        _
    $region40: #{conv3d_bn_relu.3} parent=5 // pred_fallthru
      _
  $region6: #{conv3d_bn_relu.3} parent=0 // loop_footer
    %s13 = sadd.s32 1, %s9
  $region7: #{conv3d_bn_relu.3} parent=0 // loop_footer_branch
    %8 = sbr.rel target = $region3
  $region8: #{conv3d_bn_relu.3} parent=0 // loop_exit
    _

</llo_original>
